<compile_context>
chip_gen: v5e
topology: v5e:2x2
jax: 0.10.0
libtpu: 0.0.40
codegen_flags: <defaults>
</compile_context>

<pallas_src>
import functools

import jax
import jax.numpy as jnp
from jax.experimental import pallas as pl
from jax.experimental.pallas import tpu as pltpu

_SUBLANE = 8        # batch tile granularity
_MAX_BLOCK_B = 256  # cap batch tile: fills the MXU M dim, bounds padding waste


def _round_up(n, m):
    return ((n + m - 1) // m) * m


def _default_block_b(B):
    """Batch tile: >=2 grid steps when B >= 16 (v7x has 2 TCs), tile <= 256,
    padding waste < 1 tile."""
    if B < 2 * _SUBLANE:
        return _round_up(max(B, 1), _SUBLANE)
    n_steps = max(2, pl.cdiv(B, _MAX_BLOCK_B))
    return _round_up(pl.cdiv(B, n_steps), _SUBLANE)


def _head_kernel(x_ref, w1_ref, b1_ref, w2_ref, b2_ref, o_ref):
    # Fused: linear1 -> (dropout = identity at eval) -> ReLU -> linear2, all in VMEM.
    x = x_ref[...].astype(w1_ref.dtype)                   # in-kernel cast (VPU, ~free)
    h = jnp.dot(x, w1_ref[...], preferred_element_type=jnp.float32)
    h = jnp.maximum(h + b1_ref[...], 0.0)                 # bias + ReLU (VPU)
    out = jnp.dot(h.astype(w2_ref.dtype), w2_ref[...],
                  preferred_element_type=jnp.float32)
    o_ref[...] = (out + b2_ref[...]).astype(o_ref.dtype)


def prepare_params(w1, b1, w2, b2, *, use_bf16=True):
    """One-time parameter prep (call OUTSIDE the per-step hot path).

    w1: (D, H), w2: (H, C) stored (in_features, out_features) so the kernel does x @ W + b.
    Biases are reshaped to (1, N) and kept f32; weights are optionally cast to bf16
    (MXU-native operand dtype; accumulation stays f32 inside the kernel).
    """
    wdt = jnp.bfloat16 if use_bf16 else jnp.float32
    w1 = jnp.asarray(w1).astype(wdt)
    w2 = jnp.asarray(w2).astype(wdt)
    b1 = jnp.asarray(b1).reshape(1, -1).astype(jnp.float32)
    b2 = jnp.asarray(b2).reshape(1, -1).astype(jnp.float32)
    return w1, b1, w2, b2


@functools.partial(jax.jit, static_argnames=("block_b",))
def classifier_head_forward(x, w1, b1, w2, b2, *, block_b=None):
    """x: (B, D); (w1, b1, w2, b2) from prepare_params(). Returns logits (B, C)."""
    B, D = x.shape
    Dw, H = w1.shape
    Hw, C = w2.shape
    assert D == Dw and H == Hw and b1.shape == (1, H) and b2.shape == (1, C)

    if block_b is None:
        block_b = _default_block_b(B)
    Bp = _round_up(B, block_b)
    x_p = x if Bp == B else jnp.pad(x, ((0, Bp - B), (0, 0)))   # batch-only pad

    x_item = x.dtype.itemsize
    w_item = w1.dtype.itemsize
    o_item = x.dtype.itemsize
    weight_bytes = (D * H + H * C) * w_item + (H + C) * 4
    # Actual VMEM need: double-buffered x/out tiles + (2x-buffered) resident weights.
    vmem_est = 2 * block_b * (D * x_item + C * o_item) + 2 * weight_bytes
    vmem_limit = int(min(100 * 1024 * 1024, max(8 * 1024 * 1024, 2 * vmem_est)))

    # TODO(synk): if this head is reused with large hidden sizes (2x-buffered weight
    # bytes > ~24 MiB on v7x / ~56 MiB on v5e/v6e), switch to a trailing "arbitrary"
    # K grid axis over D with an f32 acc scratch (pl.when init/finalize), tk=128 on
    # v5e / 256 on v6e+, instead of keeping the full weights resident.

    cost = pl.CostEstimate(
        flops=2 * B * (D * H + H * C),
        transcendentals=0,
        bytes_accessed=B * D * x_item + weight_bytes + B * C * o_item,
    )

    out = pl.pallas_call(
        _head_kernel,
        out_shape=jax.ShapeDtypeStruct((Bp, C), x.dtype),
        grid_spec=pltpu.PrefetchScalarGridSpec(
            num_scalar_prefetch=0,
            grid=(Bp // block_b,),
            in_specs=[
                pl.BlockSpec((block_b, D), lambda i: (i, 0)),  # x tile (full-D block)
                pl.BlockSpec((D, H), lambda i: (0, 0)),        # W1 (resident)
                pl.BlockSpec((1, H), lambda i: (0, 0)),        # b1
                pl.BlockSpec((H, C), lambda i: (0, 0)),        # W2 (resident)
                pl.BlockSpec((1, C), lambda i: (0, 0)),        # b2
            ],
            out_specs=pl.BlockSpec((block_b, C), lambda i: (i, 0)),  # unpadded (B, C)
        ),
        compiler_params=pltpu.CompilerParams(
            dimension_semantics=("parallel",),   # batch tiles shard across TCs (v7x)
            vmem_limit_bytes=vmem_limit,
        ),
        cost_estimate=cost,
    )(x_p, w1, b1, w2, b2)

    return out if Bp == B else out[:B]


def init_params(key, output_layers, n_classes):
    """Deterministic PyTorch-style (uniform +-1/sqrt(fan_in)) init, (in, out) layout."""
    k1, k2, k3, k4 = jax.random.split(key, 4)
    bound1 = 1.0 / jnp.sqrt(output_layers)
    w1 = jax.random.uniform(k1, (output_layers, output_layers), jnp.float32,
                            -bound1, bound1)
    b1 = jax.random.uniform(k2, (output_layers,), jnp.float32, -bound1, bound1)
    bound2 = 1.0 / jnp.sqrt(output_layers)
    w2 = jax.random.uniform(k3, (output_layers, n_classes), jnp.float32,
                            -bound2, bound2)
    b2 = jax.random.uniform(k4, (n_classes,), jnp.float32, -bound2, bound2)
    return w1, b1, w2, b2


if __name__ == "__main__":
    # TODO(synk): training-mode Dropout (random mask + 1/(1-p) scale) is not implemented;
    # this kernel is the inference (eval) forward pass only.
    output_layers = 32   # == D (in/out features of linear1)
    n_classes = 5
    batch = 16

    key = jax.random.PRNGKey(0)
    kx, kp = jax.random.split(key)
    x = jax.random.normal(kx, (batch, output_layers), jnp.float32)
    w1, b1, w2, b2 = init_params(kp, output_layers, n_classes)

    # pure-JAX f32 reference
    ref = jnp.maximum(x @ w1 + b1[None, :], 0.0) @ w2 + b2[None, :]

    # bf16-operand path (default): weights prepared once, x cast inside the kernel
    params_bf16 = prepare_params(w1, b1, w2, b2, use_bf16=True)
    out = jax.block_until_ready(classifier_head_forward(x, *params_bf16))
    assert out.shape == (batch, n_classes)
    assert jnp.allclose(out, ref, atol=3e-2, rtol=3e-2), \
        f"max abs err {jnp.max(jnp.abs(out - ref))}"

    # exact-f32 path
    params_f32 = prepare_params(w1, b1, w2, b2, use_bf16=False)
    out_f32 = jax.block_until_ready(classifier_head_forward(x, *params_f32))
    assert jnp.allclose(out_f32, ref, atol=1e-5, rtol=1e-5), \
        f"max abs err {jnp.max(jnp.abs(out_f32 - ref))}"

    print("KERNEL_OK")
</pallas_src>

<mosaic_0001>
module attributes {stable_mosaic.version = 11 : i64} {
  func.func @_head_kernel(%arg0: i32, %arg1: memref<8x32xf32, #tpu.memory_space<vmem>>, %arg2: memref<32x32xbf16, #tpu.memory_space<vmem>>, %arg3: memref<1x32xf32, #tpu.memory_space<vmem>>, %arg4: memref<32x5xbf16, #tpu.memory_space<vmem>>, %arg5: memref<1x5xf32, #tpu.memory_space<vmem>>, %arg6: memref<8x5xf32, #tpu.memory_space<vmem>>) attributes {dimension_semantics = [#tpu.dimension_semantics<parallel>], iteration_bounds = array<i64: 2>, scalar_prefetch = 0 : i64, scratch_operands = 0 : i64, tpu.core_type = #tpu.core_type<tc>, window_params = [{transform_indices = @transform_0, window_bounds = array<i64: 8, 32>}, {pipeline_mode = #tpu.pipeline_mode<synchronous>, transform_indices = @transform_1, window_bounds = array<i64: 32, 32>}, {pipeline_mode = #tpu.pipeline_mode<synchronous>, transform_indices = @transform_2, window_bounds = array<i64: 1, 32>}, {pipeline_mode = #tpu.pipeline_mode<synchronous>, transform_indices = @transform_3, window_bounds = array<i64: 32, 5>}, {pipeline_mode = #tpu.pipeline_mode<synchronous>, transform_indices = @transform_4, window_bounds = array<i64: 1, 5>}, {transform_indices = @transform_5, window_bounds = array<i64: 8, 5>}]} {
    %c0 = arith.constant 0 : index
    %c0_0 = arith.constant 0 : index
    %0 = vector.load %arg1[%c0, %c0_0] : memref<8x32xf32, #tpu.memory_space<vmem>>, vector<8x32xf32>
    %1 = arith.truncf %0 : vector<8x32xf32> to vector<8x32xbf16>
    %c0_1 = arith.constant 0 : index
    %c0_2 = arith.constant 0 : index
    %2 = vector.load %arg2[%c0_1, %c0_2] : memref<32x32xbf16, #tpu.memory_space<vmem>>, vector<32x32xbf16>
    %cst = arith.constant dense<0.000000e+00> : vector<8x32xf32>
    %3 = tpu.matmul %1, %2, %cst {dimension_numbers = #tpu.dot_dimension_numbers<[1], [0], [0], [1], [0, 0, 1, 1], [], []>} : vector<8x32xbf16>, vector<32x32xbf16>, vector<8x32xf32> -> vector<8x32xf32>
    %c0_3 = arith.constant 0 : index
    %c0_4 = arith.constant 0 : index
    %4 = vector.load %arg3[%c0_3, %c0_4] : memref<1x32xf32, #tpu.memory_space<vmem>>, vector<1x32xf32>
    %5 = vector.broadcast %4 : vector<1x32xf32> to vector<8x32xf32>
    %6 = arith.addf %3, %5 : vector<8x32xf32>
    %cst_5 = arith.constant 0.000000e+00 : f32
    %7 = vector.broadcast %cst_5 : f32 to vector<8x32xf32>
    %8 = arith.maximumf %6, %7 : vector<8x32xf32>
    %9 = arith.truncf %8 : vector<8x32xf32> to vector<8x32xbf16>
    %c0_6 = arith.constant 0 : index
    %c0_7 = arith.constant 0 : index
    %10 = vector.load %arg4[%c0_6, %c0_7] : memref<32x5xbf16, #tpu.memory_space<vmem>>, vector<32x5xbf16>
    %cst_8 = arith.constant dense<0.000000e+00> : vector<8x5xf32>
    %11 = tpu.matmul %9, %10, %cst_8 {dimension_numbers = #tpu.dot_dimension_numbers<[1], [0], [0], [1], [0, 0, 1, 1], [], []>} : vector<8x32xbf16>, vector<32x5xbf16>, vector<8x5xf32> -> vector<8x5xf32>
    %c0_9 = arith.constant 0 : index
    %c0_10 = arith.constant 0 : index
    %12 = vector.load %arg5[%c0_9, %c0_10] : memref<1x5xf32, #tpu.memory_space<vmem>>, vector<1x5xf32>
    %13 = vector.broadcast %12 : vector<1x5xf32> to vector<8x5xf32>
    %14 = arith.addf %11, %13 : vector<8x5xf32>
    %c0_11 = arith.constant 0 : index
    %c0_12 = arith.constant 0 : index
    %15 = vector.load %arg6[%c0_11, %c0_12] : memref<8x5xf32, #tpu.memory_space<vmem>>, vector<8x5xf32>
    tpu.vector_store %arg6[%c0_11, %c0_12], %14 {strides = array<i32>} : memref<8x5xf32, #tpu.memory_space<vmem>>, vector<8x5xf32>,
    return
  }
  func.func @transform_0(%arg0: i32) -> (i32, i32) {
    %c0_i32 = arith.constant 0 : i32
    %c0_i32_0 = arith.constant 0 : i32
    return %arg0, %c0_i32 : i32, i32
  }
  func.func @transform_1(%arg0: i32) -> (i32, i32) {
    %c0_i32 = arith.constant 0 : i32
    %c0_i32_0 = arith.constant 0 : i32
    %c0_i32_1 = arith.constant 0 : i32
    return %c0_i32, %c0_i32_0 : i32, i32
  }
  func.func @transform_2(%arg0: i32) -> (i32, i32) {
    %c0_i32 = arith.constant 0 : i32
    %c0_i32_0 = arith.constant 0 : i32
    %c0_i32_1 = arith.constant 0 : i32
    return %c0_i32, %c0_i32_0 : i32, i32
  }
  func.func @transform_3(%arg0: i32) -> (i32, i32) {
    %c0_i32 = arith.constant 0 : i32
    %c0_i32_0 = arith.constant 0 : i32
    %c0_i32_1 = arith.constant 0 : i32
    return %c0_i32, %c0_i32_0 : i32, i32
  }
  func.func @transform_4(%arg0: i32) -> (i32, i32) {
    %c0_i32 = arith.constant 0 : i32
    %c0_i32_0 = arith.constant 0 : i32
    %c0_i32_1 = arith.constant 0 : i32
    return %c0_i32, %c0_i32_0 : i32, i32
  }
  func.func @transform_5(%arg0: i32) -> (i32, i32) {
    %c0_i32 = arith.constant 0 : i32
    %c0_i32_0 = arith.constant 0 : i32
    return %arg0, %c0_i32 : i32, i32
  }
}

</mosaic_0001>

<llo_original>
// kernel: classifier_head_forward.1
$region0: #{classifier_head_forward.1}
  #allocation0 [shape = 'u32[]', space=smem, size = 0x4, offset = 0x4, fixed_abs, tag = 'smem constant byte address 0x4 - core index']
  #allocation1 [shape = 'u32[72,128]{1,0:T(1,128)}', space=vmem, size = 0x9000, scoped, tag = 'internal scratch']
  %s0 = inlined_call_operand.vmem [shape: f32[16,32], index: 0, kind: input, shape index: {}]
  %s1 = inlined_call_operand.hbm [shape: bf16[32,32], index: 1, kind: input, shape index: {}]
  %s2 = inlined_call_operand.vmem [shape: f32[1,32], index: 2, kind: input, shape index: {}]
  %s3 = inlined_call_operand.vmem [shape: bf16[32,5], index: 3, kind: input, shape index: {}]
  %s4 = inlined_call_operand.vmem [shape: f32[1,5], index: 4, kind: input, shape index: {}]
  %s5 = inlined_call_operand.vmem [shape: f32[16,5], index: 5, kind: output, shape index: {}]
  %s6 = sld [smem:[#allocation0]]
  $region57: #{classifier_head_forward.1} parent=0
    _
  %s8 = ssub.s32 1, %s6
  %s9 = scalar_select 0, %s8, %s6
  $region1: #{classifier_head_forward.1} parent=0
    #allocation2 [shape = 'u8[8192]{0}', space=vmem, size = 0x2000, scoped, tag = 'input window, operand 1, single buffered']
    #allocation3 [shape = 's32[2]{0}', space=sflag, size = 0x8, scoped, tag = 'scoped memory for classifier_head_forward.1']
    %10 = vsyncpa [#allocation3], 0
    loop: start=0, step=1, limit=4
    $region2: #{classifier_head_forward.1} parent=1 // loop_pre_header
      _
    $region3: #{classifier_head_forward.1} parent=1 // loop_header
      %s12 = sphi 0, %s16
      %p13 = scmp.ge.s32.totalorder %s12, 4
      %s22 = sphi 0, %s24
      %s25 = sphi 0, %s22
      %s26 = sphi 0, %s25
      %s42 = sphi 0, %s26
      %s46 = sphi 0, %s46
      %s48 = sphi 0, %s46
      %s49 = sphi 0, %s48
      %s63 = sphi 0, %s49
      %s67 = sphi 0, %s67
      %s69 = sphi 0, %s67
      %s70 = sphi 0, %s69
      %s84 = sphi 0, %s70
      %s88 = sphi 0, %s88
      %s90 = sphi 0, %s88
      %s91 = sphi 0, %s90
      %s105 = sphi 0, %s91
      %s109 = sphi 0, %s109
      %s111 = sphi 0, %s109
      %s112 = sphi 0, %s111
      %s126 = sphi 0, %s112
      %s132 = sphi 0, %s134
      %s135 = sphi 0, %s132
      %s136 = sphi 0, %s135
      %s152 = sphi 0, %s136
    $region4: #{classifier_head_forward.1} parent=1 // loop_header_branch
      %15 = sbr.rel (%p13) target = $region8
    $region5: #{classifier_head_forward.1} parent=1 // loop_body
      %s17 = ssub.s32 %s12, 1
      %s18 = ssub.s32 %s12, 2
      %s19 = sadd.s32 %s12, 1
      %s20 = ssub.s32 %s12, %s19
      %p21 = scmp.eq.s32.totalorder %s20, 0
      %s23 = sadd.s32 %s22, 1
      %s24 = scalar_select %p21, %s22, %s23
      %p27 = pneg %p21
      %p28 = scmp.eq.s32.totalorder %s12, 1
      %p29 = por %p27, %p28
      %p30 = scmp.ne.s32.totalorder %s22, %s25
      %p31 = scmp.eq.s32.totalorder %s12, 0
      %p32 = por %p30, %p31
      %p33 = scmp.ne.s32.totalorder %s22, %s25
      %p34 = scmp.eq.s32.totalorder %s17, 1
      %p35 = por %p33, %p34
      %p36 = scmp.ne.s32.totalorder %s25, %s26
      %p37 = scmp.eq.s32.totalorder %s17, 0
      %p38 = por %p36, %p37
      %p39 = scmp.ne.s32.totalorder %s25, %s26
      %p40 = scmp.eq.s32.totalorder %s18, 1
      %p41 = por %p39, %p40
      %p43 = scmp.ne.s32.totalorder %s26, %s42
      %p44 = scmp.eq.s32.totalorder %s18, 0
      %p45 = por %p43, %p44
      %s47 = sadd.s32 %s46, 1
      %p50 = scmp.eq.s32.totalorder %s12, 1
      %p51 = scmp.ne.s32.totalorder %s46, %s48
      %p52 = scmp.eq.s32.totalorder %s12, 0
      %p53 = por %p51, %p52
      %p54 = scmp.ne.s32.totalorder %s46, %s48
      %p55 = scmp.eq.s32.totalorder %s17, 1
      %p56 = por %p54, %p55
      %p57 = scmp.ne.s32.totalorder %s48, %s49
      %p58 = scmp.eq.s32.totalorder %s17, 0
      %p59 = por %p57, %p58
      %p60 = scmp.ne.s32.totalorder %s48, %s49
      %p61 = scmp.eq.s32.totalorder %s18, 1
      %p62 = por %p60, %p61
      %p64 = scmp.ne.s32.totalorder %s49, %s63
      %p65 = scmp.eq.s32.totalorder %s18, 0
      %p66 = por %p64, %p65
      %s68 = sadd.s32 %s67, 1
      %p71 = scmp.eq.s32.totalorder %s12, 1
      %p72 = scmp.ne.s32.totalorder %s67, %s69
      %p73 = scmp.eq.s32.totalorder %s12, 0
      %p74 = por %p72, %p73
      %p75 = scmp.ne.s32.totalorder %s67, %s69
      %p76 = scmp.eq.s32.totalorder %s17, 1
      %p77 = por %p75, %p76
      %p78 = scmp.ne.s32.totalorder %s69, %s70
      %p79 = scmp.eq.s32.totalorder %s17, 0
      %p80 = por %p78, %p79
      %p81 = scmp.ne.s32.totalorder %s69, %s70
      %p82 = scmp.eq.s32.totalorder %s18, 1
      %p83 = por %p81, %p82
      %p85 = scmp.ne.s32.totalorder %s70, %s84
      %p86 = scmp.eq.s32.totalorder %s18, 0
      %p87 = por %p85, %p86
      %s89 = sadd.s32 %s88, 1
      %p92 = scmp.eq.s32.totalorder %s12, 1
      %p93 = scmp.ne.s32.totalorder %s88, %s90
      %p94 = scmp.eq.s32.totalorder %s12, 0
      %p95 = por %p93, %p94
      %p96 = scmp.ne.s32.totalorder %s88, %s90
      %p97 = scmp.eq.s32.totalorder %s17, 1
      %p98 = por %p96, %p97
      %p99 = scmp.ne.s32.totalorder %s90, %s91
      %p100 = scmp.eq.s32.totalorder %s17, 0
      %p101 = por %p99, %p100
      %p102 = scmp.ne.s32.totalorder %s90, %s91
      %p103 = scmp.eq.s32.totalorder %s18, 1
      %p104 = por %p102, %p103
      %p106 = scmp.ne.s32.totalorder %s91, %s105
      %p107 = scmp.eq.s32.totalorder %s18, 0
      %p108 = por %p106, %p107
      %s110 = sadd.s32 %s109, 1
      %p113 = scmp.eq.s32.totalorder %s12, 1
      %p114 = scmp.ne.s32.totalorder %s109, %s111
      %p115 = scmp.eq.s32.totalorder %s12, 0
      %p116 = por %p114, %p115
      %p117 = scmp.ne.s32.totalorder %s109, %s111
      %p118 = scmp.eq.s32.totalorder %s17, 1
      %p119 = por %p117, %p118
      %p120 = scmp.ne.s32.totalorder %s111, %s112
      %p121 = scmp.eq.s32.totalorder %s17, 0
      %p122 = por %p120, %p121
      %p123 = scmp.ne.s32.totalorder %s111, %s112
      %p124 = scmp.eq.s32.totalorder %s18, 1
      %p125 = por %p123, %p124
      %p127 = scmp.ne.s32.totalorder %s112, %s126
      %p128 = scmp.eq.s32.totalorder %s18, 0
      %p129 = por %p127, %p128
      %s130 = ssub.s32 %s12, %s19
      %p131 = scmp.eq.s32.totalorder %s130, 0
      %s133 = sadd.s32 %s132, 1
      %s134 = scalar_select %p131, %s132, %s133
      %p137 = pneg %p131
      %p138 = scmp.eq.s32.totalorder %s12, 1
      %p139 = por %p137, %p138
      %p140 = scmp.ne.s32.totalorder %s132, %s135
      %p141 = scmp.eq.s32.totalorder %s12, 0
      %p142 = por %p140, %p141
      %p143 = scmp.ne.s32.totalorder %s132, %s135
      %p144 = scmp.eq.s32.totalorder %s17, 1
      %p145 = por %p143, %p144
      %p146 = scmp.ne.s32.totalorder %s135, %s136
      %p147 = scmp.eq.s32.totalorder %s17, 0
      %p148 = por %p146, %p147
      %p149 = scmp.ne.s32.totalorder %s135, %s136
      %p150 = scmp.eq.s32.totalorder %s18, 1
      %p151 = por %p149, %p150
      %p153 = scmp.ne.s32.totalorder %s136, %s152
      %p154 = scmp.eq.s32.totalorder %s18, 0
      %p155 = por %p153, %p154
      %p156 = scmp.le.s32.totalorder 1, %s12
      %p157 = scmp.lt.s32.totalorder %s12, 3
      %p158 = pnand %p156, %p157
      %p159 = pneg %p158
      // Predicated region
      $region9: #{classifier_head_forward.1} parent=5 // pred_check
        _
      $region10: #{classifier_head_forward.1} parent=5 // pred_check_branch
        %161 = sbr.rel (%p158) target = $region12
      $region11: #{classifier_head_forward.1} parent=5 // pred_region
        %s162 = ssub.s32 %s12, 1
        // Predicated region
        $region13: #{classifier_head_forward.1} parent=11 // pred_check
          %p163 = pneg %p59
        $region14: #{classifier_head_forward.1} parent=11 // pred_check_branch
          %165 = sbr.rel (%p163) target = $region16
        $region15: #{classifier_head_forward.1} parent=11 // pred_region
          %167 = vsyncadd [#allocation3], 0
          %s168 = sshll.u32 %s1, 4
          %s169 = int_to_ptr.hbm [resolvable:$true] %s168
          %s170 = sshll.u32 [#allocation2], 4
          %s171 = int_to_ptr.vmem [resolvable:$true] %s170
          %176 = dma.hbm_to_vmem [thread:$0]  %s169, 256, %s171, [#allocation3], 64, 64, 4
        $region16: #{classifier_head_forward.1} parent=11 // pred_fallthru
          _
        // Predicated region
        $region17: #{classifier_head_forward.1} parent=11 // pred_check
          %p177 = pneg %p80
        $region18: #{classifier_head_forward.1} parent=11 // pred_check_branch
          %179 = sbr.rel (%p177) target = $region20
        $region19: #{classifier_head_forward.1} parent=11 // pred_region
          _
        $region20: #{classifier_head_forward.1} parent=11 // pred_fallthru
          _
        // Predicated region
        $region21: #{classifier_head_forward.1} parent=11 // pred_check
          %p180 = pneg %p101
        $region22: #{classifier_head_forward.1} parent=11 // pred_check_branch
          %182 = sbr.rel (%p180) target = $region24
        $region23: #{classifier_head_forward.1} parent=11 // pred_region
          _
        $region24: #{classifier_head_forward.1} parent=11 // pred_fallthru
          _
        // Predicated region
        $region25: #{classifier_head_forward.1} parent=11 // pred_check
          %p183 = pneg %p122
        $region26: #{classifier_head_forward.1} parent=11 // pred_check_branch
          %185 = sbr.rel (%p183) target = $region28
        $region27: #{classifier_head_forward.1} parent=11 // pred_region
          _
        $region28: #{classifier_head_forward.1} parent=11 // pred_fallthru
          _
      $region12: #{classifier_head_forward.1} parent=5 // pred_fallthru
        _
      %p186 = scmp.lt.s32.totalorder %s12, 2
      // Predicated region
      $region29: #{classifier_head_forward.1} parent=5 // pred_check
        %p187 = pneg %p186
      $region30: #{classifier_head_forward.1} parent=5 // pred_check_branch
        %189 = sbr.rel (%p187) target = $region32
      $region31: #{classifier_head_forward.1} parent=5 // pred_region
        // Predicated region
        $region33: #{classifier_head_forward.1} parent=31 // pred_check
          %p190 = pneg %p32
        $region34: #{classifier_head_forward.1} parent=31 // pred_check_branch
          %192 = sbr.rel (%p190) target = $region36
        $region35: #{classifier_head_forward.1} parent=31 // pred_region
          %p193 = scmp.lt.s32.totalorder %s12, 1
          %s194 = scalar_select %p193, %s12, 1
          %s195 = smul.addr %s194, 8
          %s196 = scalar_lea.vmem %s0, %s195
        $region36: #{classifier_head_forward.1} parent=31 // pred_fallthru
          _
      $region32: #{classifier_head_forward.1} parent=5 // pred_fallthru
        _
      %p197 = scmp.le.s32.totalorder 1, %s12
      %p198 = scmp.lt.s32.totalorder %s12, 3
      %p199 = pnand %p197, %p198
      %p200 = pneg %p199
      // Predicated region
      $region37: #{classifier_head_forward.1} parent=5 // pred_check
        _
      $region38: #{classifier_head_forward.1} parent=5 // pred_check_branch
        %202 = sbr.rel (%p199) target = $region40
      $region39: #{classifier_head_forward.1} parent=5 // pred_region
        %s203 = ssub.s32 %s12, 1
        // Predicated region
        $region41: #{classifier_head_forward.1} parent=39 // pred_check
          %p204 = pneg %p59
        $region42: #{classifier_head_forward.1} parent=39 // pred_check_branch
          %206 = sbr.rel (%p204) target = $region44
        $region43: #{classifier_head_forward.1} parent=39 // pred_region
          %208 = dma.done [#allocation3], 256
        $region44: #{classifier_head_forward.1} parent=39 // pred_fallthru
          _
        %p209 = scmp.lt.s32.totalorder %s17, 1
        %s210 = scalar_select %p209, %s17, 1
        %s211 = smul.addr %s210, 8
        %s212 = scalar_lea.vmem %s0, %s211
        %p213 = pneg %p38
        %p214 = pneg %p35
        %p215 = pneg %p59
        %p216 = pneg %p56
        %p217 = pneg %p80
        %p218 = pneg %p77
        %p219 = pneg %p101
        %p220 = pneg %p98
        %p221 = pneg %p122
        %p222 = pneg %p119
        %p223 = pneg %p148
        %p224 = pneg %p145
        %p225 = scmp.lt.s32.totalorder %s17, 1
        %s226 = scalar_select %p225, %s17, 1
        %s227 = smul.addr %s226, 8
        %s228 = scalar_lea.vmem %s5, %s227
        %p229 = scmp.lt.s32.totalorder %s17, 1
        %s230 = scalar_select %p229, %s17, 1
        %s231 = smul.addr %s230, 8
        %s232 = scalar_lea.vmem %s0, %s231
        %p233 = scmp.lt.s32.totalorder %s17, 1
        %s234 = scalar_select %p233, %s17, 1
        %s235 = smul.addr %s234, 8
        %s236 = scalar_lea.vmem %s5, %s235
        %v238 = vld [vmem:[%s232] sm:$0xff]
        %v239 = vpack.c.bf16 %v238, %v238
        %v240 = vld [vmem:[#allocation2] sm:$0xf]
        %v241 = vld [vmem:[#allocation2 + $0x4] sm:$0xf]
        %v242 = vld [vmem:[#allocation2 + $0x8] sm:$0xf]
        %v243 = vld [vmem:[#allocation2 + $0xc] sm:$0xf]
        %v244 = vld [vmem:[%s2] sm:$0x1]
        %v246 = vperm.slane %v244, 0
        %v252 = vunpack.c.l.b16 %v240
        %v253 = vunpack.c.l.b16 %v241
        %v254 = vunpack.c.l.b16 %v242
        %v255 = vunpack.c.l.b16 %v243
        %v256 = vpack.c.b16 %v253, %v252
        %v257 = vpack.c.b16 %v255, %v254
        %vm260 = vcmask 261120
        %v262 = vsel %vm260, %v239, 0
        %264 = vmatpush.bf16.msra.mxu0 0
        %265 = vmatpush.bf16.msra.mxu0 0
        %266 = vmatpush.bf16.msra.mxu0 0
        %267 = vmatpush.bf16.msra.mxu0 0
        %268 = vmatpush.bf16.msra.mxu0 0
        %269 = vmatpush.bf16.msra.mxu0 0
        %270 = vmatpush.bf16.msra.mxu0 %v257
        %271 = vmatpush.bf16.msra.mxu0 %v256
        %272 = vmatmul.bf16.gmra.mxu0 %v262
        %v273 = vpop.f32.mrf.mxu0
        %v274 = vadd.f32 %v246, %v273
        %v275 = vpop.f32.mrf.mxu0
        %276 = vdwg.mxu0
        %v277 = vmax.f32 %v274, 0.0
        %v278 = vpack.c.bf16 %v277, %v277
        %v279 = vld [vmem:[%s3] sm:$0xf]
        %v280 = vld [vmem:[%s3 + $0x4] sm:$0xf]
        %v281 = vld [vmem:[%s3 + $0x8] sm:$0xf]
        %v282 = vld [vmem:[%s3 + $0xc] sm:$0xf]
        %v283 = vld [vmem:[%s4] sm:$0x1]
        %v285 = vperm.slane %v283, 0
        %v291 = vunpack.c.l.b16 %v279
        %v292 = vunpack.c.l.b16 %v280
        %v293 = vunpack.c.l.b16 %v281
        %v294 = vunpack.c.l.b16 %v282
        %v295 = vpack.c.b16 %v292, %v291
        %v296 = vpack.c.b16 %v294, %v293
        %v300 = vsel %vm260, %v278, 0
        %302 = vmatpush.bf16.msra.mxu0 0
        %303 = vmatpush.bf16.msra.mxu0 0
        %304 = vmatpush.bf16.msra.mxu0 0
        %305 = vmatpush.bf16.msra.mxu0 0
        %306 = vmatpush.bf16.msra.mxu0 0
        %307 = vmatpush.bf16.msra.mxu0 0
        %308 = vmatpush.bf16.msra.mxu0 %v296
        %309 = vmatpush.bf16.msra.mxu0 %v295
        %310 = vmatmul.bf16.gmra.mxu0 %v300
        %v311 = vpop.f32.mrf.mxu0
        %v312 = vadd.f32 %v285, %v311
        %v313 = vpop.f32.mrf.mxu0
        %314 = vdwg.mxu0
        %vm315 = vcmask 39936
        %316 = vst.msk [vmem:[%s236] sm:$0xff] %vm315, %v312
        %p317 = scmp.lt.s32.totalorder %s17, 1
        %s318 = scalar_select %p317, %s17, 1
        %s319 = smul.addr %s318, 8
        %s320 = scalar_lea.vmem %s5, %s319
        // Predicated region
        $region45: #{classifier_head_forward.1} parent=39 // pred_check
          %p321 = pneg %p145
        $region46: #{classifier_head_forward.1} parent=39 // pred_check_branch
          %323 = sbr.rel (%p321) target = $region48
        $region47: #{classifier_head_forward.1} parent=39 // pred_region
          _
        $region48: #{classifier_head_forward.1} parent=39 // pred_fallthru
          _
      $region40: #{classifier_head_forward.1} parent=5 // pred_fallthru
        _
      %p324 = scmp.le.s32.totalorder 2, %s12
      // Predicated region
      $region49: #{classifier_head_forward.1} parent=5 // pred_check
        %p325 = pneg %p324
      $region50: #{classifier_head_forward.1} parent=5 // pred_check_branch
        %327 = sbr.rel (%p325) target = $region52
      $region51: #{classifier_head_forward.1} parent=5 // pred_region
        %s328 = ssub.s32 %s12, 2
        // Predicated region
        $region53: #{classifier_head_forward.1} parent=51 // pred_check
          %p329 = pneg %p151
        $region54: #{classifier_head_forward.1} parent=51 // pred_check_branch
          %331 = sbr.rel (%p329) target = $region56
        $region55: #{classifier_head_forward.1} parent=51 // pred_region
          %p332 = scmp.lt.s32.totalorder %s18, 1
          %s333 = scalar_select %p332, %s18, 1
          %s334 = smul.addr %s333, 8
          %s335 = scalar_lea.vmem %s5, %s334
        $region56: #{classifier_head_forward.1} parent=51 // pred_fallthru
          _
      $region52: #{classifier_head_forward.1} parent=5 // pred_fallthru
        _
    $region6: #{classifier_head_forward.1} parent=1 // loop_footer
      %s16 = sadd.s32 1, %s12
    $region7: #{classifier_head_forward.1} parent=1 // loop_footer_branch
      %11 = sbr.rel target = $region3
    $region8: #{classifier_head_forward.1} parent=1 // loop_exit
      _
    %336 = vsyncpa [#allocation3], 1
    %s337 = scalar_lea.sflag [#allocation3], 1
    %338 = vsyncpa %s337, 1

</llo_original>
